<compile_context>
chip_gen: v5e
topology: v5e:2x2
jax: 0.10.0
libtpu: 0.0.40
codegen_flags: <defaults>
</compile_context>

<pallas_src>
import jax
import jax.numpy as jnp
from jax.experimental import pallas as pl
from jax.experimental.pallas import tpu as pltpu

OUT_H = 256
OUT_W = 256
TILE_OH = 128          # output-row tile (OUT_H must be a multiple of this)


def _interp_matrix(out_size, in_size):
    # PyTorch bilinear, align_corners=False: src = (i+0.5)*in/out - 0.5, edge-clamped.
    # Every row sums to 1 (partition of unity), so adding the conv bias after the
    # interpolation is exact.
    i = jnp.arange(out_size, dtype=jnp.float32)
    src = (i + 0.5) * (in_size / out_size) - 0.5
    src = jnp.clip(src, 0.0, float(in_size - 1))
    i0 = jnp.floor(src).astype(jnp.int32)
    i0 = jnp.minimum(i0, in_size - 1)
    i1 = jnp.minimum(i0 + 1, in_size - 1)
    frac = src - i0.astype(jnp.float32)
    rows = jnp.arange(out_size)
    w = jnp.zeros((out_size, in_size), jnp.float32)
    w = w.at[rows, i0].add(1.0 - frac)
    w = w.at[rows, i1].add(frac)
    return w


def _decoder_kernel(pat_ref, w1_ref, b1_ref, w2_ref, b2_ref,
                    c_ref, bt_ref, wr_ref, wct_ref, o_ref):
    # pat_ref: (1, HW, KP) bf16 im2col patches of one batch element.
    pat = pat_ref[0]
    # conv1 (3x3) as bf16 MXU matmul + bias + ReLU -> (HW, 64) f32
    h = jnp.dot(pat, w1_ref[...], preferred_element_type=jnp.float32)
    h = jnp.maximum(h + b1_ref[...], 0.0)
    # conv2 (1x1, single out channel) as VPU multiply + lane reduce -> (HW, 1)
    y = jnp.sum(h * w2_ref[...], axis=-1, keepdims=True)
    # "reshape" (HW,1) -> (H,W) via indicator matmul: Y = Bt @ (y * C)
    # (C scatters y into its column, Bt collapses each row-block; avoids jnp.reshape)
    u = y * c_ref[...]                                                    # (HW, W)
    ymat = jnp.dot(bt_ref[...], u, preferred_element_type=jnp.float32)    # (H, W)
    # separable bilinear upsample for this tile of output rows
    tmp = jnp.dot(wr_ref[...], ymat, preferred_element_type=jnp.float32)  # (TILE_OH, W)
    out = jnp.dot(tmp, wct_ref[...], preferred_element_type=jnp.float32)  # (TILE_OH, OUT_W)
    # b2 is a scalar in SMEM; interp rows sum to 1 so adding it after interp is exact.
    o_ref[0, 0] = out + b2_ref[0]


@jax.jit
def decoder_forward(x, w1, b1, w2, b2):
    B, C, H, W = x.shape
    HW = H * W
    K = 9 * C
    KP = ((K + 127) // 128) * 128          # lane-dense contraction dim

    # ---- host-side glue (under jit): im2col + parameter repacking ----
    # TODO(synk): for large encoder maps, move the 3x3 im2col into the kernel
    # (DMA a padded activation tile + shifted slices) to avoid 9x HBM traffic.
    xpad = jnp.pad(x, ((0, 0), (0, 0), (1, 1), (1, 1)))
    cols = []
    for dy in range(3):
        for dx in range(3):
            cols.append(xpad[:, :, dy:dy + H, dx:dx + W])      # (B, C, H, W)
    pat = jnp.stack(cols, axis=1)                              # (B, 9, C, H, W)
    pat = pat.transpose(0, 3, 4, 1, 2).reshape(B, HW, K)       # feat = (dy*3+dx)*C + c
    pat = jnp.pad(pat, ((0, 0), (0, 0), (0, KP - K))).astype(jnp.bfloat16)

    w1m = jnp.transpose(w1, (2, 3, 1, 0)).reshape(K, 64)       # (kh,kw,c,o) -> (9C, 64)
    w1m = jnp.pad(w1m, ((0, KP - K), (0, 0))).astype(jnp.bfloat16)
    b1m = b1.reshape(1, 64).astype(jnp.float32)
    w2m = w2.reshape(1, 64).astype(jnp.float32)                # 1x1 conv weight as a row
    b2m = b2.reshape(1).astype(jnp.float32)                    # SMEM scalar

    wr = _interp_matrix(OUT_H, H)                              # (OUT_H, H)
    wct = _interp_matrix(OUT_W, W).T                           # (W, OUT_W)
    # Indicator matrices used to lay the flattened conv output out as (H, W):
    bt = jnp.kron(jnp.eye(H, dtype=jnp.float32),
                  jnp.ones((1, W), jnp.float32))               # (H, HW)
    cm = jnp.kron(jnp.ones((H, 1), jnp.float32),
                  jnp.eye(W, dtype=jnp.float32))               # (HW, W)

    nj = OUT_H // TILE_OH
    out = pl.pallas_call(
        _decoder_kernel,
        out_shape=jax.ShapeDtypeStruct((B, 1, OUT_H, OUT_W), jnp.float32),
        grid=(B, nj),
        in_specs=[
            pl.BlockSpec((1, HW, KP), lambda b, j: (b, 0, 0)),     # pat (bf16)
            pl.BlockSpec((KP, 64), lambda b, j: (0, 0)),           # w1m (bf16)
            pl.BlockSpec((1, 64), lambda b, j: (0, 0)),            # b1
            pl.BlockSpec((1, 64), lambda b, j: (0, 0)),            # w2 row
            pl.BlockSpec(memory_space=pltpu.MemorySpace.SMEM),     # b2 scalar
            pl.BlockSpec((HW, W), lambda b, j: (0, 0)),            # C   (HW, W)
            pl.BlockSpec((H, HW), lambda b, j: (0, 0)),            # Bt  (H, HW)
            pl.BlockSpec((TILE_OH, H), lambda b, j: (j, 0)),       # Wr row tile
            pl.BlockSpec((W, OUT_W), lambda b, j: (0, 0)),         # Wc^T
        ],
        out_specs=pl.BlockSpec((1, 1, TILE_OH, OUT_W), lambda b, j: (b, 0, j, 0)),
        compiler_params=pltpu.CompilerParams(
            dimension_semantics=("parallel", "parallel")),
    )(pat, w1m, b1m, w2m, b2m, cm, bt, wr, wct)
    return out


def decoder_reference(x, w1, b1, w2, b2):
    # Pure-JAX reference (independent code path) for a sanity check.
    y1 = jax.lax.conv_general_dilated(
        x, w1, window_strides=(1, 1), padding=((1, 1), (1, 1)),
        dimension_numbers=("NCHW", "OIHW", "NCHW"))
    y1 = jnp.maximum(y1 + b1.reshape(1, -1, 1, 1), 0.0)
    y2 = jax.lax.conv_general_dilated(
        y1, w2, window_strides=(1, 1), padding="VALID",
        dimension_numbers=("NCHW", "OIHW", "NCHW")) + b2.reshape(1, -1, 1, 1)
    wr = _interp_matrix(OUT_H, x.shape[2])
    wc = _interp_matrix(OUT_W, x.shape[3])
    return jnp.einsum("Ih,bchw,Jw->bcIJ", wr, y2, wc)


if __name__ == "__main__":
    B, C, H, W = 2, 4, 16, 16          # encoder_output_channels = 4, small spatial map
    key = jax.random.PRNGKey(0)
    k1, k2, k3, k4, k5 = jax.random.split(key, 5)
    w1 = jax.random.normal(k1, (64, C, 3, 3), jnp.float32) * 0.1   # Conv2d(C,64,3,pad=1) weight
    b1 = jax.random.normal(k2, (64,), jnp.float32) * 0.1           # its bias
    w2 = jax.random.normal(k3, (1, 64, 1, 1), jnp.float32) * 0.1   # Conv2d(64,1,1) weight
    b2 = jax.random.normal(k4, (1,), jnp.float32) * 0.1            # its bias
    x = jax.random.normal(k5, (B, C, H, W), jnp.float32)           # NCHW input

    out = jax.block_until_ready(decoder_forward(x, w1, b1, w2, b2))
    assert out.shape == (B, 1, OUT_H, OUT_W), out.shape

    ref = jax.block_until_ready(decoder_reference(x, w1, b1, w2, b2))
    max_err = float(jnp.max(jnp.abs(out - ref)))
    # conv1 operands are bf16 -> allow slightly looser atol than pure-f32.
    assert jnp.allclose(out, ref, rtol=3e-2, atol=1e-2), max_err

    print("KERNEL_OK")
</pallas_src>

<mosaic_0001>
module attributes {stable_mosaic.version = 11 : i64} {
  func.func @_decoder_kernel(%arg0: i32, %arg1: i32, %arg2: memref<1x256x128xbf16, #tpu.memory_space<vmem>>, %arg3: memref<128x64xbf16, #tpu.memory_space<vmem>>, %arg4: memref<1x64xf32, #tpu.memory_space<vmem>>, %arg5: memref<1x64xf32, #tpu.memory_space<vmem>>, %arg6: memref<1xf32, #tpu.memory_space<smem>>, %arg7: memref<256x16xf32, #tpu.memory_space<vmem>>, %arg8: memref<16x256xf32, #tpu.memory_space<vmem>>, %arg9: memref<128x16xf32, #tpu.memory_space<vmem>>, %arg10: memref<16x256xf32, #tpu.memory_space<vmem>>, %arg11: memref<1x1x128x256xf32, #tpu.memory_space<vmem>>) attributes {dimension_semantics = [#tpu.dimension_semantics<parallel>, #tpu.dimension_semantics<parallel>], iteration_bounds = array<i64: 2, 2>, scalar_prefetch = 0 : i64, scratch_operands = 0 : i64, tpu.core_type = #tpu.core_type<tc>, window_params = [{transform_indices = @transform_0, window_bounds = array<i64: 1, 256, 128>}, {pipeline_mode = #tpu.pipeline_mode<synchronous>, transform_indices = @transform_1, window_bounds = array<i64: 128, 64>}, {pipeline_mode = #tpu.pipeline_mode<synchronous>, transform_indices = @transform_2, window_bounds = array<i64: 1, 64>}, {pipeline_mode = #tpu.pipeline_mode<synchronous>, transform_indices = @transform_3, window_bounds = array<i64: 1, 64>}, {transform_indices = @transform_4, window_bounds = array<i64: 1>}, {pipeline_mode = #tpu.pipeline_mode<synchronous>, transform_indices = @transform_5, window_bounds = array<i64: 256, 16>}, {pipeline_mode = #tpu.pipeline_mode<synchronous>, transform_indices = @transform_6, window_bounds = array<i64: 16, 256>}, {transform_indices = @transform_7, window_bounds = array<i64: 128, 16>}, {pipeline_mode = #tpu.pipeline_mode<synchronous>, transform_indices = @transform_8, window_bounds = array<i64: 16, 256>}, {transform_indices = @transform_9, window_bounds = array<i64: 1, 1, 128, 256>}]} {
    %c0 = arith.constant 0 : index
    %c0_0 = arith.constant 0 : index
    %c0_1 = arith.constant 0 : index
    %0 = vector.load %arg2[%c0, %c0_0, %c0_1] : memref<1x256x128xbf16, #tpu.memory_space<vmem>>, vector<1x256x128xbf16>
    %1 = vector.shape_cast %0 : vector<1x256x128xbf16> to vector<256x128xbf16>
    %c0_2 = arith.constant 0 : index
    %c0_3 = arith.constant 0 : index
    %2 = vector.load %arg3[%c0_2, %c0_3] : memref<128x64xbf16, #tpu.memory_space<vmem>>, vector<128x64xbf16>
    %cst = arith.constant dense<0.000000e+00> : vector<256x64xf32>
    %3 = tpu.matmul %1, %2, %cst {dimension_numbers = #tpu.dot_dimension_numbers<[1], [0], [0], [1], [0, 0, 1, 1], [], []>} : vector<256x128xbf16>, vector<128x64xbf16>, vector<256x64xf32> -> vector<256x64xf32>
    %c0_4 = arith.constant 0 : index
    %c0_5 = arith.constant 0 : index
    %4 = vector.load %arg4[%c0_4, %c0_5] : memref<1x64xf32, #tpu.memory_space<vmem>>, vector<1x64xf32>
    %5 = vector.broadcast %4 : vector<1x64xf32> to vector<256x64xf32>
    %6 = arith.addf %3, %5 : vector<256x64xf32>
    %cst_6 = arith.constant 0.000000e+00 : f32
    %7 = vector.broadcast %cst_6 : f32 to vector<256x64xf32>
    %8 = arith.maximumf %6, %7 : vector<256x64xf32>
    %c0_7 = arith.constant 0 : index
    %c0_8 = arith.constant 0 : index
    %9 = vector.load %arg5[%c0_7, %c0_8] : memref<1x64xf32, #tpu.memory_space<vmem>>, vector<1x64xf32>
    %10 = vector.broadcast %9 : vector<1x64xf32> to vector<256x64xf32>
    %11 = arith.mulf %8, %10 : vector<256x64xf32>
    %cst_9 = arith.constant dense<0.000000e+00> : vector<256xf32>
    %12 = vector.multi_reduction <add>, %11, %cst_9 [1] : vector<256x64xf32> to vector<256xf32>
    %13 = vector.shape_cast %12 : vector<256xf32> to vector<256x1xf32>
    %c0_10 = arith.constant 0 : index
    %c0_11 = arith.constant 0 : index
    %14 = vector.load %arg7[%c0_10, %c0_11] : memref<256x16xf32, #tpu.memory_space<vmem>>, vector<256x16xf32>
    %15 = vector.broadcast %13 : vector<256x1xf32> to vector<256x16xf32>
    %16 = arith.mulf %15, %14 : vector<256x16xf32>
    %c0_12 = arith.constant 0 : index
    %c0_13 = arith.constant 0 : index
    %17 = vector.load %arg8[%c0_12, %c0_13] : memref<16x256xf32, #tpu.memory_space<vmem>>, vector<16x256xf32>
    %cst_14 = arith.constant dense<0.000000e+00> : vector<16x16xf32>
    %18 = tpu.matmul %17, %16, %cst_14 {dimension_numbers = #tpu.dot_dimension_numbers<[1], [0], [0], [1], [0, 0, 1, 1], [], []>} : vector<16x256xf32>, vector<256x16xf32>, vector<16x16xf32> -> vector<16x16xf32>
    %c0_15 = arith.constant 0 : index
    %c0_16 = arith.constant 0 : index
    %19 = vector.load %arg9[%c0_15, %c0_16] : memref<128x16xf32, #tpu.memory_space<vmem>>, vector<128x16xf32>
    %cst_17 = arith.constant dense<0.000000e+00> : vector<128x16xf32>
    %20 = tpu.matmul %19, %18, %cst_17 {dimension_numbers = #tpu.dot_dimension_numbers<[1], [0], [0], [1], [0, 0, 1, 1], [], []>} : vector<128x16xf32>, vector<16x16xf32>, vector<128x16xf32> -> vector<128x16xf32>
    %c0_18 = arith.constant 0 : index
    %c0_19 = arith.constant 0 : index
    %21 = vector.load %arg10[%c0_18, %c0_19] : memref<16x256xf32, #tpu.memory_space<vmem>>, vector<16x256xf32>
    %cst_20 = arith.constant dense<0.000000e+00> : vector<128x256xf32>
    %22 = tpu.matmul %20, %21, %cst_20 {dimension_numbers = #tpu.dot_dimension_numbers<[1], [0], [0], [1], [0, 0, 1, 1], [], []>} : vector<128x16xf32>, vector<16x256xf32>, vector<128x256xf32> -> vector<128x256xf32>
    %c0_21 = arith.constant 0 : index
    %23 = memref.load %arg6[%c0_21] : memref<1xf32, #tpu.memory_space<smem>>
    %24 = vector.broadcast %23 : f32 to vector<128x256xf32>
    %25 = arith.addf %22, %24 : vector<128x256xf32>
    %c0_22 = arith.constant 0 : index
    %c0_23 = arith.constant 0 : index
    %c0_24 = arith.constant 0 : index
    %c0_25 = arith.constant 0 : index
    %26 = vector.load %arg11[%c0_22, %c0_23, %c0_24, %c0_25] : memref<1x1x128x256xf32, #tpu.memory_space<vmem>>, vector<1x1x128x256xf32>
    %27 = vector.shape_cast %26 : vector<1x1x128x256xf32> to vector<128x256xf32>
    %28 = vector.shape_cast %25 : vector<128x256xf32> to vector<1x1x128x256xf32>
    tpu.vector_store %arg11[%c0_22, %c0_23, %c0_24, %c0_25], %28 {strides = array<i32>} : memref<1x1x128x256xf32, #tpu.memory_space<vmem>>, vector<1x1x128x256xf32>,
    return
  }
  func.func @transform_0(%arg0: i32, %arg1: i32) -> (i32, i32, i32) {
    %c0_i32 = arith.constant 0 : i32
    %c0_i32_0 = arith.constant 0 : i32
    %c0_i32_1 = arith.constant 0 : i32
    return %arg0, %c0_i32, %c0_i32_0 : i32, i32, i32
  }
  func.func @transform_1(%arg0: i32, %arg1: i32) -> (i32, i32) {
    %c0_i32 = arith.constant 0 : i32
    %c0_i32_0 = arith.constant 0 : i32
    %c0_i32_1 = arith.constant 0 : i32
    return %c0_i32, %c0_i32_0 : i32, i32
  }
  func.func @transform_2(%arg0: i32, %arg1: i32) -> (i32, i32) {
    %c0_i32 = arith.constant 0 : i32
    %c0_i32_0 = arith.constant 0 : i32
    %c0_i32_1 = arith.constant 0 : i32
    return %c0_i32, %c0_i32_0 : i32, i32
  }
  func.func @transform_3(%arg0: i32, %arg1: i32) -> (i32, i32) {
    %c0_i32 = arith.constant 0 : i32
    %c0_i32_0 = arith.constant 0 : i32
    %c0_i32_1 = arith.constant 0 : i32
    return %c0_i32, %c0_i32_0 : i32, i32
  }
  func.func @transform_4(%arg0: i32, %arg1: i32) -> i32 {
    %c0_i32 = arith.constant 0 : i32
    %c0_i32_0 = arith.constant 0 : i32
    return %c0_i32 : i32
  }
  func.func @transform_5(%arg0: i32, %arg1: i32) -> (i32, i32) {
    %c0_i32 = arith.constant 0 : i32
    %c0_i32_0 = arith.constant 0 : i32
    %c0_i32_1 = arith.constant 0 : i32
    return %c0_i32, %c0_i32_0 : i32, i32
  }
  func.func @transform_6(%arg0: i32, %arg1: i32) -> (i32, i32) {
    %c0_i32 = arith.constant 0 : i32
    %c0_i32_0 = arith.constant 0 : i32
    %c0_i32_1 = arith.constant 0 : i32
    return %c0_i32, %c0_i32_0 : i32, i32
  }
  func.func @transform_7(%arg0: i32, %arg1: i32) -> (i32, i32) {
    %c0_i32 = arith.constant 0 : i32
    %c0_i32_0 = arith.constant 0 : i32
    return %arg1, %c0_i32 : i32, i32
  }
  func.func @transform_8(%arg0: i32, %arg1: i32) -> (i32, i32) {
    %c0_i32 = arith.constant 0 : i32
    %c0_i32_0 = arith.constant 0 : i32
    %c0_i32_1 = arith.constant 0 : i32
    return %c0_i32, %c0_i32_0 : i32, i32
  }
  func.func @transform_9(%arg0: i32, %arg1: i32) -> (i32, i32, i32, i32) {
    %c0_i32 = arith.constant 0 : i32
    %c0_i32_0 = arith.constant 0 : i32
    %c0_i32_1 = arith.constant 0 : i32
    return %arg0, %c0_i32, %arg1, %c0_i32_0 : i32, i32, i32, i32
  }
}

</mosaic_0001>

<llo_original>
// kernel: decoder_forward.1
$region0: #{decoder_forward.1}
  #allocation0 [shape = 'u32[]', space=smem, size = 0x4, offset = 0x4, fixed_abs, tag = 'smem constant byte address 0x4 - core index']
  #allocation1 [shape = 'u32[72,128]{1,0:T(1,128)}', space=vmem, size = 0x9000, scoped, tag = 'internal scratch']
  #allocation2 [shape = 'f32[1]{0:T(128)S(6)}', space=smem, size = 0x200, scoped, tag = 'scoped memory for decoder_forward.1']
  %s0 = inlined_call_operand.vmem [shape: bf16[2,256,128], index: 0, kind: input, shape index: {}]
  %s1 = inlined_call_operand.vmem [shape: bf16[128,64], index: 1, kind: input, shape index: {}]
  %s2 = inlined_call_operand.vmem [shape: f32[1,64], index: 2, kind: input, shape index: {}]
  %s3 = inlined_call_operand.vmem [shape: f32[1,64], index: 3, kind: input, shape index: {}]
  %s4 = inlined_call_operand.<no memory space> [shape: f32[1], index: 4, kind: input, shape index: {}]
  %s5 = inlined_call_operand.vmem [shape: f32[256,16], index: 5, kind: input, shape index: {}]
  %s6 = inlined_call_operand.vmem [shape: f32[16,256], index: 6, kind: input, shape index: {}]
  %s7 = inlined_call_operand.vmem [shape: f32[256,16], index: 7, kind: input, shape index: {}]
  %s8 = inlined_call_operand.vmem [shape: f32[16,256], index: 8, kind: input, shape index: {}]
  %s9 = inlined_call_operand.hbm [shape: f32[2,1,256,256], index: 9, kind: output, shape index: {}]
  %s10 = sld [smem:[#allocation0]]
  $region69: #{decoder_forward.1} parent=0
    _
  %s12 = ssub.s32 1, %s10
  %s13 = scalar_select 0, %s12, %s10
  %14 = sst [smem:[#allocation2]] %s4
  $region1: #{decoder_forward.1} parent=0
    #allocation3 [shape = 'u8[262144]{0}', space=vmem, size = 0x40000, scoped, tag = 'output window, operand 0']
    #allocation4 [shape = 's32[2]{0}', space=sflag, size = 0x8, scoped, tag = 'scoped memory for decoder_forward.1']
    %15 = vsyncpa [#allocation4], 0
    %s16 = scalar_lea.sflag [#allocation4], 1
    %17 = vsyncpa %s16, 0
    loop: start=0, step=1, limit=6
    $region2: #{decoder_forward.1} parent=1 // loop_pre_header
      _
    $region3: #{decoder_forward.1} parent=1 // loop_header
      %s19 = sphi 0, %s23
      %p20 = scmp.ge.s32.totalorder %s19, 6
      %s26 = sphi 0, %s38
      %s27 = sphi 0, %s34
      %s28 = sphi 0, %s26
      %s29 = sphi 0, %s27
      %s30 = sphi 0, %s28
      %s31 = sphi 0, %s29
      %s41 = sphi 0, %s43
      %s44 = sphi 0, %s41
      %s45 = sphi 0, %s44
      %s61 = sphi 0, %s45
      %s65 = sphi 0, %s65
      %s67 = sphi 0, %s65
      %s68 = sphi 0, %s67
      %s82 = sphi 0, %s68
      %s86 = sphi 0, %s86
      %s88 = sphi 0, %s86
      %s89 = sphi 0, %s88
      %s103 = sphi 0, %s89
      %s107 = sphi 0, %s107
      %s109 = sphi 0, %s107
      %s110 = sphi 0, %s109
      %s124 = sphi 0, %s110
      %s128 = sphi 0, %s128
      %s130 = sphi 0, %s128
      %s131 = sphi 0, %s130
      %s145 = sphi 0, %s131
      %s149 = sphi 0, %s149
      %s151 = sphi 0, %s149
      %s152 = sphi 0, %s151
      %s166 = sphi 0, %s152
      %s170 = sphi 0, %s170
      %s172 = sphi 0, %s170
      %s173 = sphi 0, %s172
      %s187 = sphi 0, %s173
      %s193 = sphi 0, %s195
      %s196 = sphi 0, %s193
      %s197 = sphi 0, %s196
      %s213 = sphi 0, %s197
      %s217 = sphi 0, %s217
      %s219 = sphi 0, %s217
      %s220 = sphi 0, %s219
      %s234 = sphi 0, %s220
      %s242 = sphi 0, %s244
      %s245 = sphi 0, %s242
      %s246 = sphi 0, %s245
      %s262 = sphi 0, %s246
    $region4: #{decoder_forward.1} parent=1 // loop_header_branch
      %22 = sbr.rel (%p20) target = $region8
    $region5: #{decoder_forward.1} parent=1 // loop_body
      %s24 = ssub.s32 %s19, 1
      %s25 = ssub.s32 %s19, 2
      %s32 = sadd.s32 1, %s27
      %p33 = scmp.ge.s32.totalorder %s32, 2
      %s34 = scalar_select %p33, 0, %s32
      %s35 = sadd.s32 1, %s26
      %s36 = scalar_select %p33, %s35, %s26
      %p37 = scmp.ge.s32.totalorder %s36, 2
      %s38 = scalar_select %p37, 0, %s36
      %s39 = ssub.s32 %s26, %s38
      %p40 = scmp.eq.s32.totalorder %s39, 0
      %s42 = sadd.s32 %s41, 1
      %s43 = scalar_select %p40, %s41, %s42
      %p46 = pneg %p40
      %p47 = scmp.eq.s32.totalorder %s19, 3
      %p48 = por %p46, %p47
      %p49 = scmp.ne.s32.totalorder %s41, %s44
      %p50 = scmp.eq.s32.totalorder %s19, 0
      %p51 = por %p49, %p50
      %p52 = scmp.ne.s32.totalorder %s41, %s44
      %p53 = scmp.eq.s32.totalorder %s24, 3
      %p54 = por %p52, %p53
      %p55 = scmp.ne.s32.totalorder %s44, %s45
      %p56 = scmp.eq.s32.totalorder %s24, 0
      %p57 = por %p55, %p56
      %p58 = scmp.ne.s32.totalorder %s44, %s45
      %p59 = scmp.eq.s32.totalorder %s25, 3
      %p60 = por %p58, %p59
      %p62 = scmp.ne.s32.totalorder %s45, %s61
      %p63 = scmp.eq.s32.totalorder %s25, 0
      %p64 = por %p62, %p63
      %s66 = sadd.s32 %s65, 1
      %p69 = scmp.eq.s32.totalorder %s19, 3
      %p70 = scmp.ne.s32.totalorder %s65, %s67
      %p71 = scmp.eq.s32.totalorder %s19, 0
      %p72 = por %p70, %p71
      %p73 = scmp.ne.s32.totalorder %s65, %s67
      %p74 = scmp.eq.s32.totalorder %s24, 3
      %p75 = por %p73, %p74
      %p76 = scmp.ne.s32.totalorder %s67, %s68
      %p77 = scmp.eq.s32.totalorder %s24, 0
      %p78 = por %p76, %p77
      %p79 = scmp.ne.s32.totalorder %s67, %s68
      %p80 = scmp.eq.s32.totalorder %s25, 3
      %p81 = por %p79, %p80
      %p83 = scmp.ne.s32.totalorder %s68, %s82
      %p84 = scmp.eq.s32.totalorder %s25, 0
      %p85 = por %p83, %p84
      %s87 = sadd.s32 %s86, 1
      %p90 = scmp.eq.s32.totalorder %s19, 3
      %p91 = scmp.ne.s32.totalorder %s86, %s88
      %p92 = scmp.eq.s32.totalorder %s19, 0
      %p93 = por %p91, %p92
      %p94 = scmp.ne.s32.totalorder %s86, %s88
      %p95 = scmp.eq.s32.totalorder %s24, 3
      %p96 = por %p94, %p95
      %p97 = scmp.ne.s32.totalorder %s88, %s89
      %p98 = scmp.eq.s32.totalorder %s24, 0
      %p99 = por %p97, %p98
      %p100 = scmp.ne.s32.totalorder %s88, %s89
      %p101 = scmp.eq.s32.totalorder %s25, 3
      %p102 = por %p100, %p101
      %p104 = scmp.ne.s32.totalorder %s89, %s103
      %p105 = scmp.eq.s32.totalorder %s25, 0
      %p106 = por %p104, %p105
      %s108 = sadd.s32 %s107, 1
      %p111 = scmp.eq.s32.totalorder %s19, 3
      %p112 = scmp.ne.s32.totalorder %s107, %s109
      %p113 = scmp.eq.s32.totalorder %s19, 0
      %p114 = por %p112, %p113
      %p115 = scmp.ne.s32.totalorder %s107, %s109
      %p116 = scmp.eq.s32.totalorder %s24, 3
      %p117 = por %p115, %p116
      %p118 = scmp.ne.s32.totalorder %s109, %s110
      %p119 = scmp.eq.s32.totalorder %s24, 0
      %p120 = por %p118, %p119
      %p121 = scmp.ne.s32.totalorder %s109, %s110
      %p122 = scmp.eq.s32.totalorder %s25, 3
      %p123 = por %p121, %p122
      %p125 = scmp.ne.s32.totalorder %s110, %s124
      %p126 = scmp.eq.s32.totalorder %s25, 0
      %p127 = por %p125, %p126
      %s129 = sadd.s32 %s128, 1
      %p132 = scmp.eq.s32.totalorder %s19, 3
      %p133 = scmp.ne.s32.totalorder %s128, %s130
      %p134 = scmp.eq.s32.totalorder %s19, 0
      %p135 = por %p133, %p134
      %p136 = scmp.ne.s32.totalorder %s128, %s130
      %p137 = scmp.eq.s32.totalorder %s24, 3
      %p138 = por %p136, %p137
      %p139 = scmp.ne.s32.totalorder %s130, %s131
      %p140 = scmp.eq.s32.totalorder %s24, 0
      %p141 = por %p139, %p140
      %p142 = scmp.ne.s32.totalorder %s130, %s131
      %p143 = scmp.eq.s32.totalorder %s25, 3
      %p144 = por %p142, %p143
      %p146 = scmp.ne.s32.totalorder %s131, %s145
      %p147 = scmp.eq.s32.totalorder %s25, 0
      %p148 = por %p146, %p147
      %s150 = sadd.s32 %s149, 1
      %p153 = scmp.eq.s32.totalorder %s19, 3
      %p154 = scmp.ne.s32.totalorder %s149, %s151
      %p155 = scmp.eq.s32.totalorder %s19, 0
      %p156 = por %p154, %p155
      %p157 = scmp.ne.s32.totalorder %s149, %s151
      %p158 = scmp.eq.s32.totalorder %s24, 3
      %p159 = por %p157, %p158
      %p160 = scmp.ne.s32.totalorder %s151, %s152
      %p161 = scmp.eq.s32.totalorder %s24, 0
      %p162 = por %p160, %p161
      %p163 = scmp.ne.s32.totalorder %s151, %s152
      %p164 = scmp.eq.s32.totalorder %s25, 3
      %p165 = por %p163, %p164
      %p167 = scmp.ne.s32.totalorder %s152, %s166
      %p168 = scmp.eq.s32.totalorder %s25, 0
      %p169 = por %p167, %p168
      %s171 = sadd.s32 %s170, 1
      %p174 = scmp.eq.s32.totalorder %s19, 3
      %p175 = scmp.ne.s32.totalorder %s170, %s172
      %p176 = scmp.eq.s32.totalorder %s19, 0
      %p177 = por %p175, %p176
      %p178 = scmp.ne.s32.totalorder %s170, %s172
      %p179 = scmp.eq.s32.totalorder %s24, 3
      %p180 = por %p178, %p179
      %p181 = scmp.ne.s32.totalorder %s172, %s173
      %p182 = scmp.eq.s32.totalorder %s24, 0
      %p183 = por %p181, %p182
      %p184 = scmp.ne.s32.totalorder %s172, %s173
      %p185 = scmp.eq.s32.totalorder %s25, 3
      %p186 = por %p184, %p185
      %p188 = scmp.ne.s32.totalorder %s173, %s187
      %p189 = scmp.eq.s32.totalorder %s25, 0
      %p190 = por %p188, %p189
      %s191 = ssub.s32 %s27, %s34
      %p192 = scmp.eq.s32.totalorder %s191, 0
      %s194 = sadd.s32 %s193, 1
      %s195 = scalar_select %p192, %s193, %s194
      %p198 = pneg %p192
      %p199 = scmp.eq.s32.totalorder %s19, 3
      %p200 = por %p198, %p199
      %p201 = scmp.ne.s32.totalorder %s193, %s196
      %p202 = scmp.eq.s32.totalorder %s19, 0
      %p203 = por %p201, %p202
      %p204 = scmp.ne.s32.totalorder %s193, %s196
      %p205 = scmp.eq.s32.totalorder %s24, 3
      %p206 = por %p204, %p205
      %p207 = scmp.ne.s32.totalorder %s196, %s197
      %p208 = scmp.eq.s32.totalorder %s24, 0
      %p209 = por %p207, %p208
      %p210 = scmp.ne.s32.totalorder %s196, %s197
      %p211 = scmp.eq.s32.totalorder %s25, 3
      %p212 = por %p210, %p211
      %p214 = scmp.ne.s32.totalorder %s197, %s213
      %p215 = scmp.eq.s32.totalorder %s25, 0
      %p216 = por %p214, %p215
      %s218 = sadd.s32 %s217, 1
      %p221 = scmp.eq.s32.totalorder %s19, 3
      %p222 = scmp.ne.s32.totalorder %s217, %s219
      %p223 = scmp.eq.s32.totalorder %s19, 0
      %p224 = por %p222, %p223
      %p225 = scmp.ne.s32.totalorder %s217, %s219
      %p226 = scmp.eq.s32.totalorder %s24, 3
      %p227 = por %p225, %p226
      %p228 = scmp.ne.s32.totalorder %s219, %s220
      %p229 = scmp.eq.s32.totalorder %s24, 0
      %p230 = por %p228, %p229
      %p231 = scmp.ne.s32.totalorder %s219, %s220
      %p232 = scmp.eq.s32.totalorder %s25, 3
      %p233 = por %p231, %p232
      %p235 = scmp.ne.s32.totalorder %s220, %s234
      %p236 = scmp.eq.s32.totalorder %s25, 0
      %p237 = por %p235, %p236
      %s238 = ssub.s32 %s26, %s38
      %s239 = ssub.s32 %s27, %s34
      %s240 = sor.u32 %s238, %s239
      %p241 = scmp.eq.s32.totalorder %s240, 0
      %s243 = sadd.s32 %s242, 1
      %s244 = scalar_select %p241, %s242, %s243
      %p247 = pneg %p241
      %p248 = scmp.eq.s32.totalorder %s19, 3
      %p249 = por %p247, %p248
      %p250 = scmp.ne.s32.totalorder %s242, %s245
      %p251 = scmp.eq.s32.totalorder %s19, 0
      %p252 = por %p250, %p251
      %p253 = scmp.ne.s32.totalorder %s242, %s245
      %p254 = scmp.eq.s32.totalorder %s24, 3
      %p255 = por %p253, %p254
      %p256 = scmp.ne.s32.totalorder %s245, %s246
      %p257 = scmp.eq.s32.totalorder %s24, 0
      %p258 = por %p256, %p257
      %p259 = scmp.ne.s32.totalorder %s245, %s246
      %p260 = scmp.eq.s32.totalorder %s25, 3
      %p261 = por %p259, %p260
      %p263 = scmp.ne.s32.totalorder %s246, %s262
      %p264 = scmp.eq.s32.totalorder %s25, 0
      %p265 = por %p263, %p264
      %p266 = scmp.le.s32.totalorder 1, %s19
      %p267 = scmp.lt.s32.totalorder %s19, 5
      %p268 = pnand %p266, %p267
      %p269 = pneg %p268
      // Predicated region
      $region9: #{decoder_forward.1} parent=5 // pred_check
        _
      $region10: #{decoder_forward.1} parent=5 // pred_check_branch
        %271 = sbr.rel (%p268) target = $region12
      $region11: #{decoder_forward.1} parent=5 // pred_region
        %s272 = ssub.s32 %s19, 1
        // Predicated region
        $region13: #{decoder_forward.1} parent=11 // pred_check
          %p273 = pneg %p78
        $region14: #{decoder_forward.1} parent=11 // pred_check_branch
          %275 = sbr.rel (%p273) target = $region16
        $region15: #{decoder_forward.1} parent=11 // pred_region
          _
        $region16: #{decoder_forward.1} parent=11 // pred_fallthru
          _
        // Predicated region
        $region17: #{decoder_forward.1} parent=11 // pred_check
          %p276 = pneg %p99
        $region18: #{decoder_forward.1} parent=11 // pred_check_branch
          %278 = sbr.rel (%p276) target = $region20
        $region19: #{decoder_forward.1} parent=11 // pred_region
          _
        $region20: #{decoder_forward.1} parent=11 // pred_fallthru
          _
        // Predicated region
        $region21: #{decoder_forward.1} parent=11 // pred_check
          %p279 = pneg %p120
        $region22: #{decoder_forward.1} parent=11 // pred_check_branch
          %281 = sbr.rel (%p279) target = $region24
        $region23: #{decoder_forward.1} parent=11 // pred_region
          _
        $region24: #{decoder_forward.1} parent=11 // pred_fallthru
          _
        // Predicated region
        $region25: #{decoder_forward.1} parent=11 // pred_check
          %p282 = pneg %p141
        $region26: #{decoder_forward.1} parent=11 // pred_check_branch
          %284 = sbr.rel (%p282) target = $region28
        $region27: #{decoder_forward.1} parent=11 // pred_region
          _
        $region28: #{decoder_forward.1} parent=11 // pred_fallthru
          _
        // Predicated region
        $region29: #{decoder_forward.1} parent=11 // pred_check
          %p285 = pneg %p162
        $region30: #{decoder_forward.1} parent=11 // pred_check_branch
          %287 = sbr.rel (%p285) target = $region32
        $region31: #{decoder_forward.1} parent=11 // pred_region
          _
        $region32: #{decoder_forward.1} parent=11 // pred_fallthru
          _
        // Predicated region
        $region33: #{decoder_forward.1} parent=11 // pred_check
          %p288 = pneg %p183
        $region34: #{decoder_forward.1} parent=11 // pred_check_branch
          %290 = sbr.rel (%p288) target = $region36
        $region35: #{decoder_forward.1} parent=11 // pred_region
          _
        $region36: #{decoder_forward.1} parent=11 // pred_fallthru
          _
        // Predicated region
        $region37: #{decoder_forward.1} parent=11 // pred_check
          %p291 = pneg %p230
        $region38: #{decoder_forward.1} parent=11 // pred_check_branch
          %293 = sbr.rel (%p291) target = $region40
        $region39: #{decoder_forward.1} parent=11 // pred_region
          _
        $region40: #{decoder_forward.1} parent=11 // pred_fallthru
          _
      $region12: #{decoder_forward.1} parent=5 // pred_fallthru
        _
      %p294 = scmp.lt.s32.totalorder %s19, 4
      // Predicated region
      $region41: #{decoder_forward.1} parent=5 // pred_check
        %p295 = pneg %p294
      $region42: #{decoder_forward.1} parent=5 // pred_check_branch
        %297 = sbr.rel (%p295) target = $region44
      $region43: #{decoder_forward.1} parent=5 // pred_region
        // Predicated region
        $region45: #{decoder_forward.1} parent=43 // pred_check
          %p298 = pneg %p51
        $region46: #{decoder_forward.1} parent=43 // pred_check_branch
          %300 = sbr.rel (%p298) target = $region48
        $region47: #{decoder_forward.1} parent=43 // pred_region
          %p301 = scmp.lt.s32.totalorder %s26, 1
          %s302 = scalar_select %p301, %s26, 1
          %s303 = smul.addr %s302, 32
          %s304 = smul.addr %s303, 4
          %s305 = scalar_lea.vmem %s0, %s304
        $region48: #{decoder_forward.1} parent=43 // pred_fallthru
          _
        // Predicated region
        $region49: #{decoder_forward.1} parent=43 // pred_check
          %p306 = pneg %p203
        $region50: #{decoder_forward.1} parent=43 // pred_check_branch
          %308 = sbr.rel (%p306) target = $region52
        $region51: #{decoder_forward.1} parent=43 // pred_region
          %s309 = smul.u32 16, %s27
          %p310 = scmp.lt.s32.totalorder %s309, 31
          %s311 = scalar_select %p310, %s309, 31
          %s312 = smul.addr %s311, 8
          %s313 = scalar_lea.vmem %s7, %s312
          %s314 = smul.u32 16, %s27
        $region52: #{decoder_forward.1} parent=43 // pred_fallthru
          _
      $region44: #{decoder_forward.1} parent=5 // pred_fallthru
        _
      %p315 = scmp.le.s32.totalorder 1, %s19
      %p316 = scmp.lt.s32.totalorder %s19, 5
      %p317 = pnand %p315, %p316
      %p318 = pneg %p317
      // Predicated region
      $region53: #{decoder_forward.1} parent=5 // pred_check
        _
      $region54: #{decoder_forward.1} parent=5 // pred_check_branch
        %320 = sbr.rel (%p317) target = $region56
      $region55: #{decoder_forward.1} parent=5 // pred_region
        %s321 = ssub.s32 %s19, 1
        %p322 = scmp.lt.s32.totalorder %s28, 1
        %s323 = scalar_select %p322, %s28, 1
        %s324 = smul.addr %s323, 32
        %s325 = smul.addr %s324, 4
        %s326 = scalar_lea.vmem %s0, %s325
        %p327 = pneg %p57
        %p328 = pneg %p54
        %p329 = pneg %p78
        %p330 = pneg %p75
        %p331 = pneg %p99
        %p332 = pneg %p96
        %p333 = pneg %p120
        %p334 = pneg %p117
        %p335 = pneg %p141
        %p336 = pneg %p138
        %p337 = pneg %p162
        %p338 = pneg %p159
        %p339 = pneg %p183
        %p340 = pneg %p180
        %s341 = smul.u32 16, %s29
        %p342 = scmp.lt.s32.totalorder %s341, 31
        %s343 = scalar_select %p342, %s341, 31
        %s344 = smul.addr %s343, 8
        %s345 = scalar_lea.vmem %s7, %s344
        %p346 = pneg %p209
        %p347 = pneg %p206
        %p348 = pneg %p230
        %p349 = pneg %p227
        %p350 = pneg %p258
        %p351 = pneg %p255
        %s352 = sand.u32 %s245, 1
        %s353 = scalar_lea.sflag [#allocation4], %s352
        %s354 = sand.u32 %s245, 1
        %s355 = smul.addr %s354, 256
        %s356 = scalar_lea.vmem [#allocation3], %s355
        %p357 = scmp.lt.s32.totalorder %s28, 1
        %s358 = scalar_select %p357, %s28, 1
        %s359 = smul.addr %s358, 32
        %s360 = smul.addr %s359, 4
        %s361 = scalar_lea.vmem %s0, %s360
        %s362 = smul.u32 16, %s29
        %p363 = scmp.lt.s32.totalorder %s362, 31
        %s364 = scalar_select %p363, %s362, 31
        %s365 = smul.addr %s364, 8
        %s366 = scalar_lea.vmem %s7, %s365
        %s367 = smul.u32 16, %s29
        %s368 = smul.u32 16, %s29
        %v369 = vld [vmem:[%s361] sm:$0xf]
        %v370 = vld [vmem:[%s361 + $0x4] sm:$0xf]
        %v371 = vld [vmem:[%s361 + $0x8] sm:$0xf]
        %v372 = vld [vmem:[%s361 + $0xc] sm:$0xf]
        %v373 = vld [vmem:[%s361 + $0x10] sm:$0xf]
        %v374 = vld [vmem:[%s361 + $0x14] sm:$0xf]
        %v375 = vld [vmem:[%s361 + $0x18] sm:$0xf]
        %v376 = vld [vmem:[%s361 + $0x1c] sm:$0xf]
        %v377 = vld [vmem:[%s361 + $0x20] sm:$0xf]
        %v378 = vld [vmem:[%s361 + $0x24] sm:$0xf]
        %v379 = vld [vmem:[%s361 + $0x28] sm:$0xf]
        %v380 = vld [vmem:[%s361 + $0x2c] sm:$0xf]
        %v381 = vld [vmem:[%s361 + $0x30] sm:$0xf]
        %v382 = vld [vmem:[%s361 + $0x34] sm:$0xf]
        %v383 = vld [vmem:[%s361 + $0x38] sm:$0xf]
        %v384 = vld [vmem:[%s361 + $0x3c] sm:$0xf]
        %v385 = vld [vmem:[%s361 + $0x40] sm:$0xf]
        %v386 = vld [vmem:[%s361 + $0x44] sm:$0xf]
        %v387 = vld [vmem:[%s361 + $0x48] sm:$0xf]
        %v388 = vld [vmem:[%s361 + $0x4c] sm:$0xf]
        %v389 = vld [vmem:[%s361 + $0x50] sm:$0xf]
        %v390 = vld [vmem:[%s361 + $0x54] sm:$0xf]
        %v391 = vld [vmem:[%s361 + $0x58] sm:$0xf]
        %v392 = vld [vmem:[%s361 + $0x5c] sm:$0xf]
        %v393 = vld [vmem:[%s361 + $0x60] sm:$0xf]
        %v394 = vld [vmem:[%s361 + $0x64] sm:$0xf]
        %v395 = vld [vmem:[%s361 + $0x68] sm:$0xf]
        %v396 = vld [vmem:[%s361 + $0x6c] sm:$0xf]
        %v397 = vld [vmem:[%s361 + $0x70] sm:$0xf]
        %v398 = vld [vmem:[%s361 + $0x74] sm:$0xf]
        %v399 = vld [vmem:[%s361 + $0x78] sm:$0xf]
        %v400 = vld [vmem:[%s361 + $0x7c] sm:$0xf]
        %v401 = vld [vmem:[%s1] sm:$0xf]
        %v402 = vld [vmem:[%s1 + $0x4] sm:$0xf]
        %v403 = vld [vmem:[%s1 + $0x8] sm:$0xf]
        %v404 = vld [vmem:[%s1 + $0xc] sm:$0xf]
        %v405 = vld [vmem:[%s1 + $0x10] sm:$0xf]
        %v406 = vld [vmem:[%s1 + $0x14] sm:$0xf]
        %v407 = vld [vmem:[%s1 + $0x18] sm:$0xf]
        %v408 = vld [vmem:[%s1 + $0x1c] sm:$0xf]
        %v409 = vld [vmem:[%s1 + $0x20] sm:$0xf]
        %v410 = vld [vmem:[%s1 + $0x24] sm:$0xf]
        %v411 = vld [vmem:[%s1 + $0x28] sm:$0xf]
        %v412 = vld [vmem:[%s1 + $0x2c] sm:$0xf]
        %v413 = vld [vmem:[%s1 + $0x30] sm:$0xf]
        %v414 = vld [vmem:[%s1 + $0x34] sm:$0xf]
        %v415 = vld [vmem:[%s1 + $0x38] sm:$0xf]
        %v416 = vld [vmem:[%s1 + $0x3c] sm:$0xf]
        %v417 = vld [vmem:[%s2] sm:$0x1]
        %v419 = vperm.slane %v417, 0
        %v453 = vunpack.c.l.b16 %v369
        %v454 = vunpack.c.l.b16 %v370
        %v455 = vunpack.c.l.b16 %v371
        %v456 = vunpack.c.l.b16 %v372
        %v457 = vunpack.c.l.b16 %v373
        %v458 = vunpack.c.l.b16 %v374
        %v459 = vunpack.c.l.b16 %v375
        %v460 = vunpack.c.l.b16 %v376
        %v461 = vunpack.c.l.b16 %v377
        %v462 = vunpack.c.l.b16 %v378
        %v463 = vunpack.c.l.b16 %v379
        %v464 = vunpack.c.l.b16 %v380
        %v465 = vunpack.c.l.b16 %v381
        %v466 = vunpack.c.l.b16 %v382
        %v467 = vunpack.c.l.b16 %v383
        %v468 = vunpack.c.l.b16 %v384
        %v469 = vunpack.c.l.b16 %v385
        %v470 = vunpack.c.l.b16 %v386
        %v471 = vunpack.c.l.b16 %v387
        %v472 = vunpack.c.l.b16 %v388
        %v473 = vunpack.c.l.b16 %v389
        %v474 = vunpack.c.l.b16 %v390
        %v475 = vunpack.c.l.b16 %v391
        %v476 = vunpack.c.l.b16 %v392
        %v477 = vunpack.c.l.b16 %v393
        %v478 = vunpack.c.l.b16 %v394
        %v479 = vunpack.c.l.b16 %v395
        %v480 = vunpack.c.l.b16 %v396
        %v481 = vunpack.c.l.b16 %v397
        %v482 = vunpack.c.l.b16 %v398
        %v483 = vunpack.c.l.b16 %v399
        %v484 = vunpack.c.l.b16 %v400
        %v485 = vpack.c.b16 %v454, %v453
        %v486 = vpack.c.b16 %v456, %v455
        %v487 = vpack.c.b16 %v458, %v457
        %v488 = vpack.c.b16 %v460, %v459
        %v489 = vpack.c.b16 %v462, %v461
        %v490 = vpack.c.b16 %v464, %v463
        %v491 = vpack.c.b16 %v466, %v465
        %v492 = vpack.c.b16 %v468, %v467
        %v493 = vpack.c.b16 %v470, %v469
        %v494 = vpack.c.b16 %v472, %v471
        %v495 = vpack.c.b16 %v474, %v473
        %v496 = vpack.c.b16 %v476, %v475
        %v497 = vpack.c.b16 %v478, %v477
        %v498 = vpack.c.b16 %v480, %v479
        %v499 = vpack.c.b16 %v482, %v481
        %v500 = vpack.c.b16 %v484, %v483
        %v533 = vunpack.c.l.b16 %v401
        %v534 = vunpack.c.l.b16 %v402
        %v535 = vunpack.c.l.b16 %v403
        %v536 = vunpack.c.l.b16 %v404
        %v537 = vunpack.c.l.b16 %v405
        %v538 = vunpack.c.l.b16 %v406
        %v539 = vunpack.c.l.b16 %v407
        %v540 = vunpack.c.l.b16 %v408
        %v541 = vunpack.c.l.b16 %v409
        %v542 = vunpack.c.l.b16 %v410
        %v543 = vunpack.c.l.b16 %v411
        %v544 = vunpack.c.l.b16 %v412
        %v545 = vunpack.c.l.b16 %v413
        %v546 = vunpack.c.l.b16 %v414
        %v547 = vunpack.c.l.b16 %v415
        %v548 = vunpack.c.l.b16 %v416
        %v549 = vpack.c.b16 %v534, %v533
        %v550 = vpack.c.b16 %v536, %v535
        %v551 = vpack.c.b16 %v538, %v537
        %v552 = vpack.c.b16 %v540, %v539
        %v553 = vpack.c.b16 %v542, %v541
        %v554 = vpack.c.b16 %v544, %v543
        %v555 = vpack.c.b16 %v546, %v545
        %v556 = vpack.c.b16 %v548, %v547
        %565 = vmatpush.bf16.msra.mxu0 %v556
        %566 = vmatpush.bf16.msra.mxu0 %v555
        %567 = vmatpush.bf16.msra.mxu0 %v554
        %568 = vmatpush.bf16.msra.mxu0 %v553
        %569 = vmatpush.bf16.msra.mxu0 %v552
        %570 = vmatpush.bf16.msra.mxu0 %v551
        %571 = vmatpush.bf16.msra.mxu0 %v550
        %572 = vmatpush.bf16.msra.mxu0 %v549
        %573 = vmatmul.bf16.gmra.mxu0 %v485
        %v574 = vpop.f32.mrf.mxu0
        %v575 = vadd.f32 %v419, %v574
        %v576 = vpop.f32.mrf.mxu0
        %v577 = vadd.f32 %v419, %v576
        %578 = vmatmul.bf16.gmra.mxu0 %v486
        %v579 = vpop.f32.mrf.mxu0
        %v580 = vadd.f32 %v419, %v579
        %v581 = vpop.f32.mrf.mxu0
        %v582 = vadd.f32 %v419, %v581
        %583 = vmatmul.bf16.gmra.mxu0 %v487
        %v584 = vpop.f32.mrf.mxu0
        %v585 = vadd.f32 %v419, %v584
        %v586 = vpop.f32.mrf.mxu0
        %v587 = vadd.f32 %v419, %v586
        %588 = vmatmul.bf16.gmra.mxu0 %v488
        %v589 = vpop.f32.mrf.mxu0
        %v590 = vadd.f32 %v419, %v589
        %v591 = vpop.f32.mrf.mxu0
        %v592 = vadd.f32 %v419, %v591
        %593 = vmatmul.bf16.gmra.mxu0 %v489
        %v594 = vpop.f32.mrf.mxu0
        %v595 = vadd.f32 %v419, %v594
        %v596 = vpop.f32.mrf.mxu0
        %v597 = vadd.f32 %v419, %v596
        %598 = vmatmul.bf16.gmra.mxu0 %v490
        %v599 = vpop.f32.mrf.mxu0
        %v600 = vadd.f32 %v419, %v599
        %v601 = vpop.f32.mrf.mxu0
        %v602 = vadd.f32 %v419, %v601
        %603 = vmatmul.bf16.gmra.mxu0 %v491
        %v604 = vpop.f32.mrf.mxu0
        %v605 = vadd.f32 %v419, %v604
        %v606 = vpop.f32.mrf.mxu0
        %v607 = vadd.f32 %v419, %v606
        %608 = vmatmul.bf16.gmra.mxu0 %v492
        %v609 = vpop.f32.mrf.mxu0
        %v610 = vadd.f32 %v419, %v609
        %v611 = vpop.f32.mrf.mxu0
        %v612 = vadd.f32 %v419, %v611
        %613 = vmatmul.bf16.gmra.mxu0 %v493
        %v614 = vpop.f32.mrf.mxu0
        %v615 = vadd.f32 %v419, %v614
        %v616 = vpop.f32.mrf.mxu0
        %v617 = vadd.f32 %v419, %v616
        %618 = vmatmul.bf16.gmra.mxu0 %v494
        %v619 = vpop.f32.mrf.mxu0
        %v620 = vadd.f32 %v419, %v619
        %v621 = vpop.f32.mrf.mxu0
        %v622 = vadd.f32 %v419, %v621
        %623 = vmatmul.bf16.gmra.mxu0 %v495
        %v624 = vpop.f32.mrf.mxu0
        %v625 = vadd.f32 %v419, %v624
        %v626 = vpop.f32.mrf.mxu0
        %v627 = vadd.f32 %v419, %v626
        %628 = vmatmul.bf16.gmra.mxu0 %v496
        %v629 = vpop.f32.mrf.mxu0
        %v630 = vadd.f32 %v419, %v629
        %v631 = vpop.f32.mrf.mxu0
        %v632 = vadd.f32 %v419, %v631
        %633 = vmatmul.bf16.gmra.mxu0 %v497
        %v634 = vpop.f32.mrf.mxu0
        %v635 = vadd.f32 %v419, %v634
        %v636 = vpop.f32.mrf.mxu0
        %v637 = vadd.f32 %v419, %v636
        %638 = vmatmul.bf16.gmra.mxu0 %v498
        %v639 = vpop.f32.mrf.mxu0
        %v640 = vadd.f32 %v419, %v639
        %v641 = vpop.f32.mrf.mxu0
        %v642 = vadd.f32 %v419, %v641
        %643 = vmatmul.bf16.gmra.mxu0 %v499
        %v644 = vpop.f32.mrf.mxu0
        %v645 = vadd.f32 %v419, %v644
        %v646 = vpop.f32.mrf.mxu0
        %v647 = vadd.f32 %v419, %v646
        %648 = vmatmul.bf16.gmra.mxu0 %v500
        %v649 = vpop.f32.mrf.mxu0
        %v650 = vadd.f32 %v419, %v649
        %v651 = vpop.f32.mrf.mxu0
        %v652 = vadd.f32 %v419, %v651
        %653 = vdwg.mxu0
        %v654 = vmax.f32 %v575, 0.0
        %v655 = vmax.f32 %v577, 0.0
        %v656 = vmax.f32 %v580, 0.0
        %v657 = vmax.f32 %v582, 0.0
        %v658 = vmax.f32 %v585, 0.0
        %v659 = vmax.f32 %v587, 0.0
        %v660 = vmax.f32 %v590, 0.0
        %v661 = vmax.f32 %v592, 0.0
        %v662 = vmax.f32 %v595, 0.0
        %v663 = vmax.f32 %v597, 0.0
        %v664 = vmax.f32 %v600, 0.0
        %v665 = vmax.f32 %v602, 0.0
        %v666 = vmax.f32 %v605, 0.0
        %v667 = vmax.f32 %v607, 0.0
        %v668 = vmax.f32 %v610, 0.0
        %v669 = vmax.f32 %v612, 0.0
        %v670 = vmax.f32 %v615, 0.0
        %v671 = vmax.f32 %v617, 0.0
        %v672 = vmax.f32 %v620, 0.0
        %v673 = vmax.f32 %v622, 0.0
        %v674 = vmax.f32 %v625, 0.0
        %v675 = vmax.f32 %v627, 0.0
        %v676 = vmax.f32 %v630, 0.0
        %v677 = vmax.f32 %v632, 0.0
        %v678 = vmax.f32 %v635, 0.0
        %v679 = vmax.f32 %v637, 0.0
        %v680 = vmax.f32 %v640, 0.0
        %v681 = vmax.f32 %v642, 0.0
        %v682 = vmax.f32 %v645, 0.0
        %v683 = vmax.f32 %v647, 0.0
        %v684 = vmax.f32 %v650, 0.0
        %v685 = vmax.f32 %v652, 0.0
        %v686 = vld [vmem:[%s3] sm:$0x1]
        %v688 = vperm.slane %v686, 0
        %v690 = vmul.f32 %v654, %v688
        %v691 = vmul.f32 %v655, %v688
        %v692 = vmul.f32 %v656, %v688
        %v693 = vmul.f32 %v657, %v688
        %v694 = vmul.f32 %v658, %v688
        %v695 = vmul.f32 %v659, %v688
        %v696 = vmul.f32 %v660, %v688
        %v697 = vmul.f32 %v661, %v688
        %v698 = vmul.f32 %v662, %v688
        %v699 = vmul.f32 %v663, %v688
        %v700 = vmul.f32 %v664, %v688
        %v701 = vmul.f32 %v665, %v688
        %v702 = vmul.f32 %v666, %v688
        %v703 = vmul.f32 %v667, %v688
        %v704 = vmul.f32 %v668, %v688
        %v705 = vmul.f32 %v669, %v688
        %v706 = vmul.f32 %v670, %v688
        %v707 = vmul.f32 %v671, %v688
        %v708 = vmul.f32 %v672, %v688
        %v709 = vmul.f32 %v673, %v688
        %v710 = vmul.f32 %v674, %v688
        %v711 = vmul.f32 %v675, %v688
        %v712 = vmul.f32 %v676, %v688
        %v713 = vmul.f32 %v677, %v688
        %v714 = vmul.f32 %v678, %v688
        %v715 = vmul.f32 %v679, %v688
        %v716 = vmul.f32 %v680, %v688
        %v717 = vmul.f32 %v681, %v688
        %v718 = vmul.f32 %v682, %v688
        %v719 = vmul.f32 %v683, %v688
        %v720 = vmul.f32 %v684, %v688
        %v721 = vmul.f32 %v685, %v688
        %vm722 = vcmask 523264
        %v723 = vsel %vm722, %v690, 0.0
        %724 = vadd.xlane.f32.xlu0 %v723
        %v725 = vpop.xlane.xlu0 %724
        %v726 = vsel %vm722, %v691, 0.0
        %727 = vadd.xlane.f32.xlu0 %v726
        %v728 = vpop.xlane.xlu0 %727
        %v729 = vsel %vm722, %v692, 0.0
        %730 = vadd.xlane.f32.xlu0 %v729
        %v731 = vpop.xlane.xlu0 %730
        %v732 = vsel %vm722, %v693, 0.0
        %733 = vadd.xlane.f32.xlu0 %v732
        %v734 = vpop.xlane.xlu0 %733
        %v735 = vsel %vm722, %v694, 0.0
        %736 = vadd.xlane.f32.xlu0 %v735
        %v737 = vpop.xlane.xlu0 %736
        %v738 = vsel %vm722, %v695, 0.0
        %739 = vadd.xlane.f32.xlu0 %v738
        %v740 = vpop.xlane.xlu0 %739
        %v741 = vsel %vm722, %v696, 0.0
        %742 = vadd.xlane.f32.xlu0 %v741
        %v743 = vpop.xlane.xlu0 %742
        %v744 = vsel %vm722, %v697, 0.0
        %745 = vadd.xlane.f32.xlu0 %v744
        %v746 = vpop.xlane.xlu0 %745
        %v747 = vsel %vm722, %v698, 0.0
        %748 = vadd.xlane.f32.xlu0 %v747
        %v749 = vpop.xlane.xlu0 %748
        %v750 = vsel %vm722, %v699, 0.0
        %751 = vadd.xlane.f32.xlu0 %v750
        %v752 = vpop.xlane.xlu0 %751
        %v753 = vsel %vm722, %v700, 0.0
        %754 = vadd.xlane.f32.xlu0 %v753
        %v755 = vpop.xlane.xlu0 %754
        %v756 = vsel %vm722, %v701, 0.0
        %757 = vadd.xlane.f32.xlu0 %v756
        %v758 = vpop.xlane.xlu0 %757
        %v759 = vsel %vm722, %v702, 0.0
        %760 = vadd.xlane.f32.xlu0 %v759
        %v761 = vpop.xlane.xlu0 %760
        %v762 = vsel %vm722, %v703, 0.0
        %763 = vadd.xlane.f32.xlu0 %v762
        %v764 = vpop.xlane.xlu0 %763
        %v765 = vsel %vm722, %v704, 0.0
        %766 = vadd.xlane.f32.xlu0 %v765
        %v767 = vpop.xlane.xlu0 %766
        %v768 = vsel %vm722, %v705, 0.0
        %769 = vadd.xlane.f32.xlu0 %v768
        %v770 = vpop.xlane.xlu0 %769
        %v771 = vsel %vm722, %v706, 0.0
        %772 = vadd.xlane.f32.xlu0 %v771
        %v773 = vpop.xlane.xlu0 %772
        %v774 = vsel %vm722, %v707, 0.0
        %775 = vadd.xlane.f32.xlu0 %v774
        %v776 = vpop.xlane.xlu0 %775
        %v777 = vsel %vm722, %v708, 0.0
        %778 = vadd.xlane.f32.xlu0 %v777
        %v779 = vpop.xlane.xlu0 %778
        %v780 = vsel %vm722, %v709, 0.0
        %781 = vadd.xlane.f32.xlu0 %v780
        %v782 = vpop.xlane.xlu0 %781
        %v783 = vsel %vm722, %v710, 0.0
        %784 = vadd.xlane.f32.xlu0 %v783
        %v785 = vpop.xlane.xlu0 %784
        %v786 = vsel %vm722, %v711, 0.0
        %787 = vadd.xlane.f32.xlu0 %v786
        %v788 = vpop.xlane.xlu0 %787
        %v789 = vsel %vm722, %v712, 0.0
        %790 = vadd.xlane.f32.xlu0 %v789
        %v791 = vpop.xlane.xlu0 %790
        %v792 = vsel %vm722, %v713, 0.0
        %793 = vadd.xlane.f32.xlu0 %v792
        %v794 = vpop.xlane.xlu0 %793
        %v795 = vsel %vm722, %v714, 0.0
        %796 = vadd.xlane.f32.xlu0 %v795
        %v797 = vpop.xlane.xlu0 %796
        %v798 = vsel %vm722, %v715, 0.0
        %799 = vadd.xlane.f32.xlu0 %v798
        %v800 = vpop.xlane.xlu0 %799
        %v801 = vsel %vm722, %v716, 0.0
        %802 = vadd.xlane.f32.xlu0 %v801
        %v803 = vpop.xlane.xlu0 %802
        %v804 = vsel %vm722, %v717, 0.0
        %805 = vadd.xlane.f32.xlu0 %v804
        %v806 = vpop.xlane.xlu0 %805
        %v807 = vsel %vm722, %v718, 0.0
        %808 = vadd.xlane.f32.xlu0 %v807
        %v809 = vpop.xlane.xlu0 %808
        %v810 = vsel %vm722, %v719, 0.0
        %811 = vadd.xlane.f32.xlu0 %v810
        %v812 = vpop.xlane.xlu0 %811
        %v813 = vsel %vm722, %v720, 0.0
        %814 = vadd.xlane.f32.xlu0 %v813
        %v815 = vpop.xlane.xlu0 %814
        %v816 = vsel %vm722, %v721, 0.0
        %817 = vadd.xlane.f32.xlu0 %v816
        %v818 = vpop.xlane.xlu0 %817
        %v819 = vld [vmem:[%s5] sm:$0xff]
        %v820 = vld [vmem:[%s5 + $0x8] sm:$0xff]
        %v821 = vld [vmem:[%s5 + $0x10] sm:$0xff]
        %v822 = vld [vmem:[%s5 + $0x18] sm:$0xff]
        %v823 = vld [vmem:[%s5 + $0x20] sm:$0xff]
        %v824 = vld [vmem:[%s5 + $0x28] sm:$0xff]
        %v825 = vld [vmem:[%s5 + $0x30] sm:$0xff]
        %v826 = vld [vmem:[%s5 + $0x38] sm:$0xff]
        %v827 = vld [vmem:[%s5 + $0x40] sm:$0xff]
        %v828 = vld [vmem:[%s5 + $0x48] sm:$0xff]
        %v829 = vld [vmem:[%s5 + $0x50] sm:$0xff]
        %v830 = vld [vmem:[%s5 + $0x58] sm:$0xff]
        %v831 = vld [vmem:[%s5 + $0x60] sm:$0xff]
        %v832 = vld [vmem:[%s5 + $0x68] sm:$0xff]
        %v833 = vld [vmem:[%s5 + $0x70] sm:$0xff]
        %v834 = vld [vmem:[%s5 + $0x78] sm:$0xff]
        %v835 = vld [vmem:[%s5 + $0x80] sm:$0xff]
        %v836 = vld [vmem:[%s5 + $0x88] sm:$0xff]
        %v837 = vld [vmem:[%s5 + $0x90] sm:$0xff]
        %v838 = vld [vmem:[%s5 + $0x98] sm:$0xff]
        %v839 = vld [vmem:[%s5 + $0xa0] sm:$0xff]
        %v840 = vld [vmem:[%s5 + $0xa8] sm:$0xff]
        %v841 = vld [vmem:[%s5 + $0xb0] sm:$0xff]
        %v842 = vld [vmem:[%s5 + $0xb8] sm:$0xff]
        %v843 = vld [vmem:[%s5 + $0xc0] sm:$0xff]
        %v844 = vld [vmem:[%s5 + $0xc8] sm:$0xff]
        %v845 = vld [vmem:[%s5 + $0xd0] sm:$0xff]
        %v846 = vld [vmem:[%s5 + $0xd8] sm:$0xff]
        %v847 = vld [vmem:[%s5 + $0xe0] sm:$0xff]
        %v848 = vld [vmem:[%s5 + $0xe8] sm:$0xff]
        %v849 = vld [vmem:[%s5 + $0xf0] sm:$0xff]
        %v850 = vld [vmem:[%s5 + $0xf8] sm:$0xff]
        %v851 = vmul.f32 %v725, %v819
        %v852 = vmul.f32 %v728, %v820
        %v853 = vmul.f32 %v731, %v821
        %v854 = vmul.f32 %v734, %v822
        %v855 = vmul.f32 %v737, %v823
        %v856 = vmul.f32 %v740, %v824
        %v857 = vmul.f32 %v743, %v825
        %v858 = vmul.f32 %v746, %v826
        %v859 = vmul.f32 %v749, %v827
        %v860 = vmul.f32 %v752, %v828
        %v861 = vmul.f32 %v755, %v829
        %v862 = vmul.f32 %v758, %v830
        %v863 = vmul.f32 %v761, %v831
        %v864 = vmul.f32 %v764, %v832
        %v865 = vmul.f32 %v767, %v833
        %v866 = vmul.f32 %v770, %v834
        %v867 = vmul.f32 %v773, %v835
        %v868 = vmul.f32 %v776, %v836
        %v869 = vmul.f32 %v779, %v837
        %v870 = vmul.f32 %v782, %v838
        %v871 = vmul.f32 %v785, %v839
        %v872 = vmul.f32 %v788, %v840
        %v873 = vmul.f32 %v791, %v841
        %v874 = vmul.f32 %v794, %v842
        %v875 = vmul.f32 %v797, %v843
        %v876 = vmul.f32 %v800, %v844
        %v877 = vmul.f32 %v803, %v845
        %v878 = vmul.f32 %v806, %v846
        %v879 = vmul.f32 %v809, %v847
        %v880 = vmul.f32 %v812, %v848
        %v881 = vmul.f32 %v815, %v849
        %v882 = vmul.f32 %v818, %v850
        %v883 = vld [vmem:[%s6] sm:$0xff]
        %v884 = vld [vmem:[%s6 + $0x8] sm:$0xff]
        %v885 = vld [vmem:[%s6 + $0x10] sm:$0xff]
        %v886 = vld [vmem:[%s6 + $0x18] sm:$0xff]
        %887 = vmatpush.msra.mxu0 %v866
        %888 = vmatpush.msra.mxu0 %v865
        %889 = vmatpush.msra.mxu0 %v864
        %890 = vmatpush.msra.mxu0 %v863
        %891 = vmatpush.msra.mxu0 %v862
        %892 = vmatpush.msra.mxu0 %v861
        %893 = vmatpush.msra.mxu0 %v860
        %894 = vmatpush.msra.mxu0 %v859
        %895 = vmatpush.msra.mxu0 %v858
        %896 = vmatpush.msra.mxu0 %v857
        %897 = vmatpush.msra.mxu0 %v856
        %898 = vmatpush.msra.mxu0 %v855
        %899 = vmatpush.msra.mxu0 %v854
        %900 = vmatpush.msra.mxu0 %v853
        %901 = vmatpush.msra.mxu0 %v852
        %902 = vmatpush.msra.mxu0 %v851
        %903 = vmatmul.f32.gmra.mxu0 %v883
        %v904 = vpop.f32.mrf.mxu0
        %v905 = vadd.f32 0.0, %v904
        %906 = vmatmul.f32.gmra.mxu0 %v885
        %v907 = vpop.f32.mrf.mxu0
        %v908 = vadd.f32 0.0, %v907
        %909 = vdwg.mxu0
        %910 = vmatpush.msra.mxu0 %v882
        %911 = vmatpush.msra.mxu0 %v881
        %912 = vmatpush.msra.mxu0 %v880
        %913 = vmatpush.msra.mxu0 %v879
        %914 = vmatpush.msra.mxu0 %v878
        %915 = vmatpush.msra.mxu0 %v877
        %916 = vmatpush.msra.mxu0 %v876
        %917 = vmatpush.msra.mxu0 %v875
        %918 = vmatpush.msra.mxu0 %v874
        %919 = vmatpush.msra.mxu0 %v873
        %920 = vmatpush.msra.mxu0 %v872
        %921 = vmatpush.msra.mxu0 %v871
        %922 = vmatpush.msra.mxu0 %v870
        %923 = vmatpush.msra.mxu0 %v869
        %924 = vmatpush.msra.mxu0 %v868
        %925 = vmatpush.msra.mxu0 %v867
        %926 = vmatmul.f32.gmra.mxu0 %v884
        %v927 = vpop.f32.mrf.mxu0
        %v928 = vadd.f32 %v905, %v927
        %929 = vmatmul.f32.gmra.mxu0 %v886
        %v930 = vpop.f32.mrf.mxu0
        %v931 = vadd.f32 %v908, %v930
        %932 = vdwg.mxu0
        %v933 = vld [vmem:[%s366] sm:$0xff]
        %v934 = vld [vmem:[%s366 + $0x8] sm:$0xff]
        %v935 = vld [vmem:[%s366 + $0x10] sm:$0xff]
        %v936 = vld [vmem:[%s366 + $0x18] sm:$0xff]
        %v937 = vld [vmem:[%s366 + $0x20] sm:$0xff]
        %v938 = vld [vmem:[%s366 + $0x28] sm:$0xff]
        %v939 = vld [vmem:[%s366 + $0x30] sm:$0xff]
        %v940 = vld [vmem:[%s366 + $0x38] sm:$0xff]
        %v941 = vld [vmem:[%s366 + $0x40] sm:$0xff]
        %v942 = vld [vmem:[%s366 + $0x48] sm:$0xff]
        %v943 = vld [vmem:[%s366 + $0x50] sm:$0xff]
        %v944 = vld [vmem:[%s366 + $0x58] sm:$0xff]
        %v945 = vld [vmem:[%s366 + $0x60] sm:$0xff]
        %v946 = vld [vmem:[%s366 + $0x68] sm:$0xff]
        %v947 = vld [vmem:[%s366 + $0x70] sm:$0xff]
        %v948 = vld [vmem:[%s366 + $0x78] sm:$0xff]
        %vm949 = vcmask 130048
        %v951 = vsel %vm949, %v933, 0
        %v954 = vsel %vm949, %v934, 0
        %v957 = vsel %vm949, %v935, 0
        %v960 = vsel %vm949, %v936, 0
        %v963 = vsel %vm949, %v937, 0
        %v966 = vsel %vm949, %v938, 0
        %v969 = vsel %vm949, %v939, 0
        %v972 = vsel %vm949, %v940, 0
        %v975 = vsel %vm949, %v941, 0
        %v978 = vsel %vm949, %v942, 0
        %v981 = vsel %vm949, %v943, 0
        %v984 = vsel %vm949, %v944, 0
        %v987 = vsel %vm949, %v945, 0
        %v990 = vsel %vm949, %v946, 0
        %v993 = vsel %vm949, %v947, 0
        %v996 = vsel %vm949, %v948, 0
        %998 = vmatpush.msra.mxu0 0.0
        %999 = vmatpush.msra.mxu0 0.0
        %1000 = vmatpush.msra.mxu0 0.0
        %1001 = vmatpush.msra.mxu0 0.0
        %1002 = vmatpush.msra.mxu0 0.0
        %1003 = vmatpush.msra.mxu0 0.0
        %1004 = vmatpush.msra.mxu0 0.0
        %1005 = vmatpush.msra.mxu0 0.0
        %1006 = vmatpush.msra.mxu0 0.0
        %1007 = vmatpush.msra.mxu0 0.0
        %1008 = vmatpush.msra.mxu0 0.0
        %1009 = vmatpush.msra.mxu0 0.0
        %1010 = vmatpush.msra.mxu0 0.0
        %1011 = vmatpush.msra.mxu0 0.0
        %1012 = vmatpush.msra.mxu0 %v931
        %1013 = vmatpush.msra.mxu0 %v928
        %1014 = vmatmul.f32.gmra.mxu0 %v951
        %v1015 = vpop.f32.mrf.mxu0
        %v1016 = vadd.f32 0.0, %v1015
        %1017 = vmatmul.f32.gmra.mxu0 %v954
        %v1018 = vpop.f32.mrf.mxu0
        %v1019 = vadd.f32 0.0, %v1018
        %1020 = vmatmul.f32.gmra.mxu0 %v957
        %v1021 = vpop.f32.mrf.mxu0
        %v1022 = vadd.f32 0.0, %v1021
        %1023 = vmatmul.f32.gmra.mxu0 %v960
        %v1024 = vpop.f32.mrf.mxu0
        %v1025 = vadd.f32 0.0, %v1024
        %1026 = vmatmul.f32.gmra.mxu0 %v963
        %v1027 = vpop.f32.mrf.mxu0
        %v1028 = vadd.f32 0.0, %v1027
        %1029 = vmatmul.f32.gmra.mxu0 %v966
        %v1030 = vpop.f32.mrf.mxu0
        %v1031 = vadd.f32 0.0, %v1030
        %1032 = vmatmul.f32.gmra.mxu0 %v969
        %v1033 = vpop.f32.mrf.mxu0
        %v1034 = vadd.f32 0.0, %v1033
        %1035 = vmatmul.f32.gmra.mxu0 %v972
        %v1036 = vpop.f32.mrf.mxu0
        %v1037 = vadd.f32 0.0, %v1036
        %1038 = vmatmul.f32.gmra.mxu0 %v975
        %v1039 = vpop.f32.mrf.mxu0
        %v1040 = vadd.f32 0.0, %v1039
        %1041 = vmatmul.f32.gmra.mxu0 %v978
        %v1042 = vpop.f32.mrf.mxu0
        %v1043 = vadd.f32 0.0, %v1042
        %1044 = vmatmul.f32.gmra.mxu0 %v981
        %v1045 = vpop.f32.mrf.mxu0
        %v1046 = vadd.f32 0.0, %v1045
        %1047 = vmatmul.f32.gmra.mxu0 %v984
        %v1048 = vpop.f32.mrf.mxu0
        %v1049 = vadd.f32 0.0, %v1048
        %1050 = vmatmul.f32.gmra.mxu0 %v987
        %v1051 = vpop.f32.mrf.mxu0
        %v1052 = vadd.f32 0.0, %v1051
        %1053 = vmatmul.f32.gmra.mxu0 %v990
        %v1054 = vpop.f32.mrf.mxu0
        %v1055 = vadd.f32 0.0, %v1054
        %1056 = vmatmul.f32.gmra.mxu0 %v993
        %v1057 = vpop.f32.mrf.mxu0
        %v1058 = vadd.f32 0.0, %v1057
        %1059 = vmatmul.f32.gmra.mxu0 %v996
        %v1060 = vpop.f32.mrf.mxu0
        %v1061 = vadd.f32 0.0, %v1060
        %1062 = vdwg.mxu0
        %v1063 = vld [vmem:[%s8] sm:$0xff]
        %v1064 = vld [vmem:[%s8 + $0x8] sm:$0xff]
        %v1065 = vld [vmem:[%s8 + $0x10] sm:$0xff]
        %v1066 = vld [vmem:[%s8 + $0x18] sm:$0xff]
        %s1067 = sld [smem:[#allocation2]]
        %v1068 = vstv %s1067
        %v1070 = vsel %vm949, %v1016, 0
        %v1073 = vsel %vm949, %v1019, 0
        %v1076 = vsel %vm949, %v1022, 0
        %v1079 = vsel %vm949, %v1025, 0
        %v1082 = vsel %vm949, %v1028, 0
        %v1085 = vsel %vm949, %v1031, 0
        %v1088 = vsel %vm949, %v1034, 0
        %v1091 = vsel %vm949, %v1037, 0
        %v1094 = vsel %vm949, %v1040, 0
        %v1097 = vsel %vm949, %v1043, 0
        %v1100 = vsel %vm949, %v1046, 0
        %v1103 = vsel %vm949, %v1049, 0
        %v1106 = vsel %vm949, %v1052, 0
        %v1109 = vsel %vm949, %v1055, 0
        %v1112 = vsel %vm949, %v1058, 0
        %v1115 = vsel %vm949, %v1061, 0
        %1117 = vmatpush.msra.mxu0 0.0
        %1118 = vmatpush.msra.mxu0 0.0
        %1119 = vmatpush.msra.mxu0 0.0
        %1120 = vmatpush.msra.mxu0 0.0
        %1121 = vmatpush.msra.mxu0 0.0
        %1122 = vmatpush.msra.mxu0 0.0
        %1123 = vmatpush.msra.mxu0 0.0
        %1124 = vmatpush.msra.mxu0 0.0
        %1125 = vmatpush.msra.mxu0 0.0
        %1126 = vmatpush.msra.mxu0 0.0
        %1127 = vmatpush.msra.mxu0 0.0
        %1128 = vmatpush.msra.mxu0 0.0
        %1129 = vmatpush.msra.mxu0 0.0
        %1130 = vmatpush.msra.mxu0 0.0
        %1131 = vmatpush.msra.mxu0 %v1065
        %1132 = vmatpush.msra.mxu0 %v1063
        %1133 = vmatmul.f32.gmra.mxu0 %v1070
        %v1134 = vpop.f32.mrf.mxu0
        %v1135 = vadd.f32 %v1068, %v1134
        %1136 = vmatmul.f32.gmra.mxu0 %v1073
        %v1137 = vpop.f32.mrf.mxu0
        %v1138 = vadd.f32 %v1068, %v1137
        %1139 = vmatmul.f32.gmra.mxu0 %v1076
        %v1140 = vpop.f32.mrf.mxu0
        %v1141 = vadd.f32 %v1068, %v1140
        %1142 = vmatmul.f32.gmra.mxu0 %v1079
        %v1143 = vpop.f32.mrf.mxu0
        %v1144 = vadd.f32 %v1068, %v1143
        %1145 = vmatmul.f32.gmra.mxu0 %v1082
        %v1146 = vpop.f32.mrf.mxu0
        %v1147 = vadd.f32 %v1068, %v1146
        %1148 = vmatmul.f32.gmra.mxu0 %v1085
        %v1149 = vpop.f32.mrf.mxu0
        %v1150 = vadd.f32 %v1068, %v1149
        %1151 = vmatmul.f32.gmra.mxu0 %v1088
        %v1152 = vpop.f32.mrf.mxu0
        %v1153 = vadd.f32 %v1068, %v1152
        %1154 = vmatmul.f32.gmra.mxu0 %v1091
        %v1155 = vpop.f32.mrf.mxu0
        %v1156 = vadd.f32 %v1068, %v1155
        %1157 = vmatmul.f32.gmra.mxu0 %v1094
        %v1158 = vpop.f32.mrf.mxu0
        %v1159 = vadd.f32 %v1068, %v1158
        %1160 = vmatmul.f32.gmra.mxu0 %v1097
        %v1161 = vpop.f32.mrf.mxu0
        %v1162 = vadd.f32 %v1068, %v1161
        %1163 = vmatmul.f32.gmra.mxu0 %v1100
        %v1164 = vpop.f32.mrf.mxu0
        %v1165 = vadd.f32 %v1068, %v1164
        %1166 = vmatmul.f32.gmra.mxu0 %v1103
        %v1167 = vpop.f32.mrf.mxu0
        %v1168 = vadd.f32 %v1068, %v1167
        %1169 = vmatmul.f32.gmra.mxu0 %v1106
        %v1170 = vpop.f32.mrf.mxu0
        %v1171 = vadd.f32 %v1068, %v1170
        %1172 = vmatmul.f32.gmra.mxu0 %v1109
        %v1173 = vpop.f32.mrf.mxu0
        %v1174 = vadd.f32 %v1068, %v1173
        %1175 = vmatmul.f32.gmra.mxu0 %v1112
        %v1176 = vpop.f32.mrf.mxu0
        %v1177 = vadd.f32 %v1068, %v1176
        %1178 = vmatmul.f32.gmra.mxu0 %v1115
        %v1179 = vpop.f32.mrf.mxu0
        %v1180 = vadd.f32 %v1068, %v1179
        %1181 = vdwg.mxu0
        %1182 = vmatpush.msra.mxu0 0.0
        %1183 = vmatpush.msra.mxu0 0.0
        %1184 = vmatpush.msra.mxu0 0.0
        %1185 = vmatpush.msra.mxu0 0.0
        %1186 = vmatpush.msra.mxu0 0.0
        %1187 = vmatpush.msra.mxu0 0.0
        %1188 = vmatpush.msra.mxu0 0.0
        %1189 = vmatpush.msra.mxu0 0.0
        %1190 = vmatpush.msra.mxu0 0.0
        %1191 = vmatpush.msra.mxu0 0.0
        %1192 = vmatpush.msra.mxu0 0.0
        %1193 = vmatpush.msra.mxu0 0.0
        %1194 = vmatpush.msra.mxu0 0.0
        %1195 = vmatpush.msra.mxu0 0.0
        %1196 = vmatpush.msra.mxu0 %v1066
        %1197 = vmatpush.msra.mxu0 %v1064
        %1198 = vmatmul.f32.gmra.mxu0 %v1070
        %v1199 = vpop.f32.mrf.mxu0
        %v1200 = vadd.f32 %v1068, %v1199
        %1201 = vmatmul.f32.gmra.mxu0 %v1073
        %v1202 = vpop.f32.mrf.mxu0
        %v1203 = vadd.f32 %v1068, %v1202
        %1204 = vmatmul.f32.gmra.mxu0 %v1076
        %v1205 = vpop.f32.mrf.mxu0
        %v1206 = vadd.f32 %v1068, %v1205
        %1207 = vmatmul.f32.gmra.mxu0 %v1079
        %v1208 = vpop.f32.mrf.mxu0
        %v1209 = vadd.f32 %v1068, %v1208
        %1210 = vmatmul.f32.gmra.mxu0 %v1082
        %v1211 = vpop.f32.mrf.mxu0
        %v1212 = vadd.f32 %v1068, %v1211
        %1213 = vmatmul.f32.gmra.mxu0 %v1085
        %v1214 = vpop.f32.mrf.mxu0
        %v1215 = vadd.f32 %v1068, %v1214
        %1216 = vmatmul.f32.gmra.mxu0 %v1088
        %v1217 = vpop.f32.mrf.mxu0
        %v1218 = vadd.f32 %v1068, %v1217
        %1219 = vmatmul.f32.gmra.mxu0 %v1091
        %v1220 = vpop.f32.mrf.mxu0
        %v1221 = vadd.f32 %v1068, %v1220
        %1222 = vmatmul.f32.gmra.mxu0 %v1094
        %v1223 = vpop.f32.mrf.mxu0
        %v1224 = vadd.f32 %v1068, %v1223
        %1225 = vmatmul.f32.gmra.mxu0 %v1097
        %v1226 = vpop.f32.mrf.mxu0
        %v1227 = vadd.f32 %v1068, %v1226
        %1228 = vmatmul.f32.gmra.mxu0 %v1100
        %v1229 = vpop.f32.mrf.mxu0
        %v1230 = vadd.f32 %v1068, %v1229
        %1231 = vmatmul.f32.gmra.mxu0 %v1103
        %v1232 = vpop.f32.mrf.mxu0
        %v1233 = vadd.f32 %v1068, %v1232
        %1234 = vmatmul.f32.gmra.mxu0 %v1106
        %v1235 = vpop.f32.mrf.mxu0
        %v1236 = vadd.f32 %v1068, %v1235
        %1237 = vmatmul.f32.gmra.mxu0 %v1109
        %v1238 = vpop.f32.mrf.mxu0
        %v1239 = vadd.f32 %v1068, %v1238
        %1240 = vmatmul.f32.gmra.mxu0 %v1112
        %v1241 = vpop.f32.mrf.mxu0
        %v1242 = vadd.f32 %v1068, %v1241
        %1243 = vmatmul.f32.gmra.mxu0 %v1115
        %v1244 = vpop.f32.mrf.mxu0
        %v1245 = vadd.f32 %v1068, %v1244
        %1246 = vdwg.mxu0
        %1247 = vst [vmem:[%s356] sm:$0xff] %v1135
        %1248 = vst [vmem:[%s356 + $0x8] sm:$0xff] %v1200
        %1249 = vst [vmem:[%s356 + $0x10] sm:$0xff] %v1138
        %1250 = vst [vmem:[%s356 + $0x18] sm:$0xff] %v1203
        %1251 = vst [vmem:[%s356 + $0x20] sm:$0xff] %v1141
        %1252 = vst [vmem:[%s356 + $0x28] sm:$0xff] %v1206
        %1253 = vst [vmem:[%s356 + $0x30] sm:$0xff] %v1144
        %1254 = vst [vmem:[%s356 + $0x38] sm:$0xff] %v1209
        %1255 = vst [vmem:[%s356 + $0x40] sm:$0xff] %v1147
        %1256 = vst [vmem:[%s356 + $0x48] sm:$0xff] %v1212
        %1257 = vst [vmem:[%s356 + $0x50] sm:$0xff] %v1150
        %1258 = vst [vmem:[%s356 + $0x58] sm:$0xff] %v1215
        %1259 = vst [vmem:[%s356 + $0x60] sm:$0xff] %v1153
        %1260 = vst [vmem:[%s356 + $0x68] sm:$0xff] %v1218
        %1261 = vst [vmem:[%s356 + $0x70] sm:$0xff] %v1156
        %1262 = vst [vmem:[%s356 + $0x78] sm:$0xff] %v1221
        %1263 = vst [vmem:[%s356 + $0x80] sm:$0xff] %v1159
        %1264 = vst [vmem:[%s356 + $0x88] sm:$0xff] %v1224
        %1265 = vst [vmem:[%s356 + $0x90] sm:$0xff] %v1162
        %1266 = vst [vmem:[%s356 + $0x98] sm:$0xff] %v1227
        %1267 = vst [vmem:[%s356 + $0xa0] sm:$0xff] %v1165
        %1268 = vst [vmem:[%s356 + $0xa8] sm:$0xff] %v1230
        %1269 = vst [vmem:[%s356 + $0xb0] sm:$0xff] %v1168
        %1270 = vst [vmem:[%s356 + $0xb8] sm:$0xff] %v1233
        %1271 = vst [vmem:[%s356 + $0xc0] sm:$0xff] %v1171
        %1272 = vst [vmem:[%s356 + $0xc8] sm:$0xff] %v1236
        %1273 = vst [vmem:[%s356 + $0xd0] sm:$0xff] %v1174
        %1274 = vst [vmem:[%s356 + $0xd8] sm:$0xff] %v1239
        %1275 = vst [vmem:[%s356 + $0xe0] sm:$0xff] %v1177
        %1276 = vst [vmem:[%s356 + $0xe8] sm:$0xff] %v1242
        %1277 = vst [vmem:[%s356 + $0xf0] sm:$0xff] %v1180
        %1278 = vst [vmem:[%s356 + $0xf8] sm:$0xff] %v1245
        %s1279 = sand.u32 %s245, 1
        %s1280 = scalar_lea.sflag [#allocation4], %s1279
        %s1281 = sand.u32 %s245, 1
        %s1282 = smul.addr %s1281, 256
        %s1283 = scalar_lea.vmem [#allocation3], %s1282
        // Predicated region
        $region57: #{decoder_forward.1} parent=55 // pred_check
          %p1284 = pneg %p255
        $region58: #{decoder_forward.1} parent=55 // pred_check_branch
          %1286 = sbr.rel (%p1284) target = $region60
        $region59: #{decoder_forward.1} parent=55 // pred_region
          %s1287 = smul.u32 16, %s29
          %1289 = vsyncadd %s1280, 0
          %s1290 = smul.addr %s1287, 2
          %s1291 = smul.addr %s28, 64
          %s1292 = sadd.s32 %s1290, %s1291
          %s1293 = smul.addr %s1292, 8
          %s1294 = scalar_lea.hbm %s9, %s1293
          %s1295 = sshll.u32 %s1283, 4
          %s1296 = int_to_ptr.vmem [resolvable:$true] %s1295
          %s1297 = sshll.u32 %s1294, 4
          %s1298 = int_to_ptr.hbm [resolvable:$true] %s1297
          %1303 = dma.vmem_to_hbm [thread:$0]  %s1296, 4096, %s1298, %s1280, 256, 256, 16
        $region60: #{decoder_forward.1} parent=55 // pred_fallthru
          _
      $region56: #{decoder_forward.1} parent=5 // pred_fallthru
        _
      %p1304 = scmp.le.s32.totalorder 2, %s19
      // Predicated region
      $region61: #{decoder_forward.1} parent=5 // pred_check
        %p1305 = pneg %p1304
      $region62: #{decoder_forward.1} parent=5 // pred_check_branch
        %1307 = sbr.rel (%p1305) target = $region64
      $region63: #{decoder_forward.1} parent=5 // pred_region
        %s1308 = ssub.s32 %s19, 2
        // Predicated region
        $region65: #{decoder_forward.1} parent=63 // pred_check
          %p1309 = pneg %p261
        $region66: #{decoder_forward.1} parent=63 // pred_check_branch
          %1311 = sbr.rel (%p1309) target = $region68
        $region67: #{decoder_forward.1} parent=63 // pred_region
          %s1312 = sand.u32 %s246, 1
          %s1313 = scalar_lea.sflag [#allocation4], %s1312
          %s1314 = sand.u32 %s246, 1
          %s1315 = smul.addr %s1314, 256
          %s1316 = scalar_lea.vmem [#allocation3], %s1315
          %1318 = dma.done %s1313, 4096
        $region68: #{decoder_forward.1} parent=63 // pred_fallthru
          _
      $region64: #{decoder_forward.1} parent=5 // pred_fallthru
        _
    $region6: #{decoder_forward.1} parent=1 // loop_footer
      %s23 = sadd.s32 1, %s19
    $region7: #{decoder_forward.1} parent=1 // loop_footer_branch
      %18 = sbr.rel target = $region3
    $region8: #{decoder_forward.1} parent=1 // loop_exit
      _
    %1319 = vsyncpa [#allocation4], 1
    %s1320 = scalar_lea.sflag [#allocation4], 1
    %1321 = vsyncpa %s1320, 1

</llo_original>
